<compile_context>
chip_gen: v7x
topology: tpu7x:2x2x1
jax: 0.10.0
libtpu: 0.0.40
codegen_flags: <defaults>
</compile_context>

<pallas_src>
import jax
import jax.numpy as jnp
from jax.experimental import pallas as pl
from jax.experimental.pallas import tpu as pltpu


def _band_matrix(w_scaled, rows, cols, col_offset, stride, ksize, dtype):
    """band[m, n] = weight[col_offset + n - m*stride] / K, 0 outside the window."""
    m_i = jnp.arange(rows)[:, None]
    n_i = jnp.arange(cols)[None, :]
    k_i = col_offset + n_i - m_i * stride
    ok = (k_i >= 0) & (k_i < ksize)
    return jnp.where(ok, w_scaled[jnp.clip(k_i, 0, ksize - 1)], 0.0).astype(dtype)


def _make_tiled_kernel(*, tm, stride, n_rows, n_b, mask_a):
    """Per-M-tile windowed reduction: y_tile = Wa @ x_slab + sum_j Wb_j @ halo_j + bias."""
    rows_a = tm * stride

    def kernel(*refs):
        xa_ref = refs[0]
        xb_refs = refs[1:1 + n_b]
        pos = 1 + n_b
        wa_ref = refs[pos]
        pos += 1
        wb_ref = None
        if n_b:
            wb_ref = refs[pos]
            pos += 1
        bias_ref = refs[pos]
        pos += 1
        y_ref = refs[pos]

        i = pl.program_id(1)

        xa = xa_ref[0]  # (tm*stride, HD), native dtype
        if mask_a:
            # Last A slab may read past the sequence end; zero the stale tail so
            # 0-weights never multiply undefined data.
            ridx = jax.lax.broadcasted_iota(jnp.int32, (rows_a, 1), 0)
            xa = jnp.where(i * rows_a + ridx < n_rows, xa, 0)

        acc = jnp.dot(wa_ref[...], xa, preferred_element_type=jnp.float32)  # (tm, HD)

        for j in range(n_b):
            xb = xb_refs[j][0]  # (stride, HD) halo chunk
            ridx = jax.lax.broadcasted_iota(jnp.int32, (stride, 1), 0)
            start = ((i + 1) * tm + j) * stride
            xb = jnp.where(start + ridx < n_rows, xb, 0)
            acc = acc + jnp.dot(
                wb_ref[:, j * stride:(j + 1) * stride], xb,
                preferred_element_type=jnp.float32)

        y_ref[0] = (acc + bias_ref[...]).astype(y_ref.dtype)

    return kernel


def _full_kernel(x_ref, w_ref, bias_ref, y_ref):
    # Small/unaligned fallback: one banded matmul per batch (w is (M, N), tiny here).
    acc = jnp.dot(w_ref[...], x_ref[0], preferred_element_type=jnp.float32)
    y_ref[0] = (acc + bias_ref[...]).astype(y_ref.dtype)


def compress_kv(x, weight, pe, stride, *, block_m=None):
    """Pallas forward of CompressKV. x: (B, N, H, D) -> y: (B, M, H, D)."""
    B, N, H, D = x.shape
    ksize = weight.shape[0]
    assert ksize % stride == 0
    assert N >= ksize
    num_blocks = (N - ksize) // stride + 1
    assert num_blocks > 0
    HD = H * D
    dtype = x.dtype

    # Fold heads into lanes (free view) — no HBM transpose passes, lane-dense output.
    x3 = x.reshape(B, N, HD)

    # Hoist grid-invariant work: fold 1/K into the weights, precompute the pe bias.
    w32 = weight.astype(jnp.float32)
    w_scaled = w32 * (1.0 / ksize)
    bias = jnp.tile(w_scaled @ pe.astype(jnp.float32), (H,)).reshape(1, HD)

    r = ksize // stride  # window = r chunks of `stride` rows

    tiled_ok = (stride % 8 == 0) and (block_m is None or block_m % 8 == 0)
    if tiled_ok:
        # ---------- tiled windowed path (production shapes) ----------
        if block_m is None:
            tm = min(128, 8 * pl.cdiv(num_blocks, 8))
            # Keep the x slab ~<= 2 MiB so double-buffering fits VMEM comfortably
            # on every generation (incl. v7x's 64 MiB).
            slab_cap = 2 * 1024 * 1024
            row_bytes = HD * x.dtype.itemsize
            while tm > 8 and tm * stride * row_bytes > slab_cap:
                tm -= 8
        else:
            tm = block_m
        mt = pl.cdiv(num_blocks, tm)
        rows_a = tm * stride
        n_b = r - 1                      # halo chunks (each `stride` rows)
        nb_s = pl.cdiv(N, stride)        # number of stride-chunks along the sequence
        mask_a = mt * rows_a > N         # last A slab ragged -> mask stale tail

        wa = _band_matrix(w_scaled, tm, rows_a, 0, stride, ksize, dtype)

        args = [x3]
        in_specs = [pl.BlockSpec((1, rows_a, HD), lambda b, i: (b, i, 0))]
        for j in range(n_b):
            args.append(x3)  # same array, halo view: chunk (i+1)*tm + j (clamped)
            in_specs.append(
                pl.BlockSpec(
                    (1, stride, HD),
                    lambda b, i, j=j: (b, jnp.minimum((i + 1) * tm + j, nb_s - 1), 0)))
        args.append(wa)
        in_specs.append(pl.BlockSpec((tm, rows_a), lambda b, i: (0, 0)))
        if n_b:
            wb = _band_matrix(w_scaled, tm, n_b * stride, rows_a, stride, ksize, dtype)
            args.append(wb)
            in_specs.append(pl.BlockSpec((tm, n_b * stride), lambda b, i: (0, 0)))
        args.append(bias)
        in_specs.append(pl.BlockSpec((1, HD), lambda b, i: (0, 0)))

        kernel = _make_tiled_kernel(tm=tm, stride=stride, n_rows=N, n_b=n_b,
                                    mask_a=mask_a)
        y3 = pl.pallas_call(
            kernel,
            out_shape=jax.ShapeDtypeStruct((B, num_blocks, HD), dtype),
            grid=(B, mt),
            in_specs=in_specs,
            out_specs=pl.BlockSpec((1, tm, HD), lambda b, i: (b, i, 0)),
            compiler_params=pltpu.CompilerParams(
                dimension_semantics=("parallel", "parallel")),
        )(*args)
    else:
        # ---------- small / unaligned fallback (e.g. stride < 8) ----------
        # Single banded matmul per batch; only used for tiny/unaligned shapes where
        # the (M, N) band matrix is small.
        w_full = _band_matrix(w_scaled, num_blocks, N, 0, stride, ksize, dtype)
        y3 = pl.pallas_call(
            _full_kernel,
            out_shape=jax.ShapeDtypeStruct((B, num_blocks, HD), dtype),
            grid=(B,),
            in_specs=[
                pl.BlockSpec((1, N, HD), lambda b: (b, 0, 0)),
                pl.BlockSpec((num_blocks, N), lambda b: (0, 0)),
                pl.BlockSpec((1, HD), lambda b: (0, 0)),
            ],
            out_specs=pl.BlockSpec((1, num_blocks, HD), lambda b: (b, 0, 0)),
            compiler_params=pltpu.CompilerParams(dimension_semantics=("parallel",)),
        )(x3, w_full, bias)

    # Free reshape back to the PyTorch output layout (B, num_blocks, H, D).
    return y3.reshape(B, num_blocks, H, D)


def compress_kv_ref(x, weight, pe, stride):
    """Pure-JAX reference of the Triton forward, for correctness checking."""
    B, N, H, D = x.shape
    K = weight.shape[0]
    num_blocks = (N - K) // stride + 1
    idx = jnp.arange(num_blocks)[:, None] * stride + jnp.arange(K)[None, :]
    win = x[:, idx]                                  # (B, M, K, H, D)
    win = win + pe[None, None, :, None, :]
    y = jnp.einsum("bmkhd,k->bmhd", win, weight) / K
    return y.astype(x.dtype)


# TODO(synk): only the forward pass is implemented; the Triton backward kernels
# (_block_compress_dwdpe / _block_compress_dx) are not needed for inference.

if __name__ == "__main__":
    key = jax.random.PRNGKey(0)

    def run_case(B, N, H, D, K, s, block_m=None):
        k1, k2, k3 = jax.random.split(jax.random.fold_in(key, N * 1000 + K), 3)
        x = jax.random.normal(k1, (B, N, H, D), dtype=jnp.float32)
        weight = jax.random.normal(k2, (K,), dtype=jnp.float32)
        pe = jax.random.normal(k3, (K, D), dtype=jnp.float32)
        y = jax.block_until_ready(compress_kv(x, weight, pe, s, block_m=block_m))
        y_ref = compress_kv_ref(x, weight, pe, s)
        assert y.shape == ((B, (N - K) // s + 1, H, D)), (y.shape, (B, N, H, D, K, s))
        assert y.dtype == x.dtype
        assert jnp.allclose(y, y_ref, atol=1e-4, rtol=1e-4), (B, N, H, D, K, s)

    # Tiled path, two M-tiles, window halo exercised (M = 16 divides the tile).
    run_case(2, 136, 4, 32, 16, 8, block_m=8)
    # Tiled path, ragged M (M = 15): masked output store + clamped halo index.
    run_case(2, 128, 4, 32, 16, 8, block_m=8)
    # Tiled path, ragged sequence tail (M = 14): in-kernel masking of the A slab.
    run_case(2, 120, 4, 32, 16, 8, block_m=8)
    # Small / unaligned shapes (stride = 4 < 8): fallback single-matmul path.
    run_case(2, 16, 4, 32, 8, 4)

    print("KERNEL_OK")
</pallas_src>

<mosaic_0001>
module attributes {stable_mosaic.version = 11 : i64} {
  func.func @kernel(%arg0: i32, %arg1: i32, %arg2: memref<1x64x128xf32, #tpu.memory_space<vmem>>, %arg3: memref<1x8x128xf32, #tpu.memory_space<vmem>>, %arg4: memref<8x64xf32, #tpu.memory_space<vmem>>, %arg5: memref<8x8xf32, #tpu.memory_space<vmem>>, %arg6: memref<1x128xf32, #tpu.memory_space<vmem>>, %arg7: memref<1x8x128xf32, #tpu.memory_space<vmem>>) attributes {dimension_semantics = [#tpu.dimension_semantics<parallel>, #tpu.dimension_semantics<parallel>], iteration_bounds = array<i64: 2, 2>, scalar_prefetch = 0 : i64, scratch_operands = 0 : i64, tpu.core_type = #tpu.core_type<tc>, window_params = [{transform_indices = @transform_0, window_bounds = array<i64: 1, 64, 128>}, {transform_indices = @transform_1, window_bounds = array<i64: 1, 8, 128>}, {pipeline_mode = #tpu.pipeline_mode<synchronous>, transform_indices = @transform_2, window_bounds = array<i64: 8, 64>}, {pipeline_mode = #tpu.pipeline_mode<synchronous>, transform_indices = @transform_3, window_bounds = array<i64: 8, 8>}, {pipeline_mode = #tpu.pipeline_mode<synchronous>, transform_indices = @transform_4, window_bounds = array<i64: 1, 128>}, {transform_indices = @transform_5, window_bounds = array<i64: 1, 8, 128>}]} {
    %c0 = arith.constant 0 : index
    %c0_0 = arith.constant 0 : index
    %c0_1 = arith.constant 0 : index
    %0 = vector.load %arg2[%c0, %c0_0, %c0_1] : memref<1x64x128xf32, #tpu.memory_space<vmem>>, vector<1x64x128xf32>
    %1 = vector.shape_cast %0 : vector<1x64x128xf32> to vector<64x128xf32>
    %c0_2 = arith.constant 0 : index
    %c0_3 = arith.constant 0 : index
    %2 = vector.load %arg4[%c0_2, %c0_3] : memref<8x64xf32, #tpu.memory_space<vmem>>, vector<8x64xf32>
    %cst = arith.constant dense<0.000000e+00> : vector<8x128xf32>
    %3 = tpu.matmul %2, %1, %cst {dimension_numbers = #tpu.dot_dimension_numbers<[1], [0], [0], [1], [0, 0, 1, 1], [], []>} : vector<8x64xf32>, vector<64x128xf32>, vector<8x128xf32> -> vector<8x128xf32>
    %c0_4 = arith.constant 0 : index
    %c0_5 = arith.constant 0 : index
    %c0_6 = arith.constant 0 : index
    %4 = vector.load %arg3[%c0_4, %c0_5, %c0_6] : memref<1x8x128xf32, #tpu.memory_space<vmem>>, vector<1x8x128xf32>
    %5 = vector.shape_cast %4 : vector<1x8x128xf32> to vector<8x128xf32>
    %6 = tpu.iota {dimensions = array<i32: 0>} : vector<8x1xi32>
    %c1_i32 = arith.constant 1 : i32
    %7 = arith.addi %arg1, %c1_i32 : i32
    %c8_i32 = arith.constant 8 : i32
    %8 = arith.muli %7, %c8_i32 : i32
    %c0_i32 = arith.constant 0 : i32
    %9 = arith.addi %8, %c0_i32 : i32
    %c8_i32_7 = arith.constant 8 : i32
    %10 = arith.muli %9, %c8_i32_7 : i32
    %11 = vector.broadcast %10 : i32 to vector<8x1xi32>
    %12 = arith.addi %11, %6 : vector<8x1xi32>
    %c136_i32 = arith.constant 136 : i32
    %13 = vector.broadcast %c136_i32 : i32 to vector<8x1xi32>
    %14 = arith.cmpi slt, %12, %13 : vector<8x1xi32>
    %c0_i32_8 = arith.constant 0 : i32
    %15 = arith.sitofp %c0_i32_8 : i32 to f32
    %16 = vector.shape_cast %14 : vector<8x1xi1> to vector<8x1xi1>
    %17 = vector.broadcast %16 : vector<8x1xi1> to vector<8x128xi1>
    %18 = vector.broadcast %15 : f32 to vector<8x128xf32>
    %19 = arith.select %17, %5, %18 : vector<8x128xi1>, vector<8x128xf32>
    %c0_9 = arith.constant 0 : index
    %c0_10 = arith.constant 0 : index
    %20 = vector.load %arg5[%c0_9, %c0_10] : memref<8x8xf32, #tpu.memory_space<vmem>>, vector<8x8xf32>
    %cst_11 = arith.constant dense<0.000000e+00> : vector<8x128xf32>
    %21 = tpu.matmul %20, %19, %cst_11 {dimension_numbers = #tpu.dot_dimension_numbers<[1], [0], [0], [1], [0, 0, 1, 1], [], []>} : vector<8x8xf32>, vector<8x128xf32>, vector<8x128xf32> -> vector<8x128xf32>
    %22 = arith.addf %3, %21 : vector<8x128xf32>
    %c0_12 = arith.constant 0 : index
    %c0_13 = arith.constant 0 : index
    %23 = vector.load %arg6[%c0_12, %c0_13] : memref<1x128xf32, #tpu.memory_space<vmem>>, vector<1x128xf32>
    %24 = vector.broadcast %23 : vector<1x128xf32> to vector<8x128xf32>
    %25 = arith.addf %22, %24 : vector<8x128xf32>
    %c0_14 = arith.constant 0 : index
    %c0_15 = arith.constant 0 : index
    %c0_16 = arith.constant 0 : index
    %26 = vector.load %arg7[%c0_14, %c0_15, %c0_16] : memref<1x8x128xf32, #tpu.memory_space<vmem>>, vector<1x8x128xf32>
    %27 = vector.shape_cast %26 : vector<1x8x128xf32> to vector<8x128xf32>
    %28 = vector.shape_cast %25 : vector<8x128xf32> to vector<1x8x128xf32>
    tpu.vector_store %arg7[%c0_14, %c0_15, %c0_16], %28 {strides = array<i32>} : memref<1x8x128xf32, #tpu.memory_space<vmem>>, vector<1x8x128xf32>,
    return
  }
  func.func @transform_0(%arg0: i32, %arg1: i32) -> (i32, i32, i32) {
    %c0_i32 = arith.constant 0 : i32
    %c0_i32_0 = arith.constant 0 : i32
    return %arg0, %arg1, %c0_i32 : i32, i32, i32
  }
  func.func @transform_1(%arg0: i32, %arg1: i32) -> (i32, i32, i32) {
    %c1_i32 = arith.constant 1 : i32
    %0 = arith.addi %arg1, %c1_i32 : i32
    %c8_i32 = arith.constant 8 : i32
    %1 = arith.muli %0, %c8_i32 : i32
    %c0_i32 = arith.constant 0 : i32
    %2 = arith.addi %1, %c0_i32 : i32
    %c16_i32 = arith.constant 16 : i32
    %3 = arith.minsi %2, %c16_i32 : i32
    %c0_i32_0 = arith.constant 0 : i32
    %c0_i32_1 = arith.constant 0 : i32
    return %arg0, %3, %c0_i32_0 : i32, i32, i32
  }
  func.func @transform_2(%arg0: i32, %arg1: i32) -> (i32, i32) {
    %c0_i32 = arith.constant 0 : i32
    %c0_i32_0 = arith.constant 0 : i32
    %c0_i32_1 = arith.constant 0 : i32
    return %c0_i32, %c0_i32_0 : i32, i32
  }
  func.func @transform_3(%arg0: i32, %arg1: i32) -> (i32, i32) {
    %c0_i32 = arith.constant 0 : i32
    %c0_i32_0 = arith.constant 0 : i32
    %c0_i32_1 = arith.constant 0 : i32
    return %c0_i32, %c0_i32_0 : i32, i32
  }
  func.func @transform_4(%arg0: i32, %arg1: i32) -> (i32, i32) {
    %c0_i32 = arith.constant 0 : i32
    %c0_i32_0 = arith.constant 0 : i32
    %c0_i32_1 = arith.constant 0 : i32
    return %c0_i32, %c0_i32_0 : i32, i32
  }
  func.func @transform_5(%arg0: i32, %arg1: i32) -> (i32, i32, i32) {
    %c0_i32 = arith.constant 0 : i32
    %c0_i32_0 = arith.constant 0 : i32
    return %arg0, %arg1, %c0_i32 : i32, i32, i32
  }
}

</mosaic_0001>

<llo_original>
// kernel: tpu_custom_call.1
$region0: #{tpu_custom_call.1}
  #allocation0 [shape = 'u32[]', space=smem, size = 0x4, offset = 0x4, fixed_abs, tag = 'smem constant byte address 0x4 - core index']
  #allocation1 [shape = 'u32[144,128]{1,0:T(1,128)}', space=vmem, size = 0x12000, scoped, tag = 'internal scratch']
  %s0 = inlined_call_operand.hbm [shape: f32[2,136,128], index: 0, kind: input, shape index: {}]
  %s1 = inlined_call_operand.hbm [shape: f32[2,136,128], index: 1, kind: input, shape index: {}]
  %s2 = inlined_call_operand.hbm [shape: f32[8,64], index: 2, kind: input, shape index: {}]
  %s3 = inlined_call_operand.vmem [shape: f32[8,8], index: 3, kind: input, shape index: {}]
  %s4 = inlined_call_operand.vmem [shape: f32[1,128], index: 4, kind: input, shape index: {}]
  %s5 = inlined_call_operand.hbm [shape: f32[2,16,128], index: 5, kind: output, shape index: {}]
  %s6 = sld [smem:[#allocation0]]
  $region65: #{tpu_custom_call.1} parent=0
    _
  %s8 = ssub.s32 1, %s6
  %s9 = scalar_select 0, %s8, %s6
  $region1: #{tpu_custom_call.1} parent=0
    #allocation2 [shape = 'u8[65536]{0}', space=vmem, size = 0x10000, scoped, tag = 'input window, operand 0']
    #allocation3 [shape = 's32[2]{0}', space=sflag, size = 0x8, scoped, tag = 'scoped memory for tpu_custom_call.1']
    #allocation4 [shape = 's32[2]{0}', space=sflag, size = 0x8, scoped, tag = 'scoped memory for tpu_custom_call.1']
    #allocation5 [shape = 'u8[8192]{0}', space=vmem, size = 0x2000, scoped, tag = 'input window, operand 1']
    #allocation6 [shape = 's32[2]{0}', space=sflag, size = 0x8, scoped, tag = 'scoped memory for tpu_custom_call.1']
    #allocation7 [shape = 'u8[4096]{0}', space=vmem, size = 0x1000, scoped, tag = 'input window, operand 2, single buffered']
    #allocation8 [shape = 'u8[8192]{0}', space=vmem, size = 0x2000, scoped, tag = 'output window, operand 0']
    %10 = vsyncpa [#allocation3], 0
    %s11 = scalar_lea.sflag [#allocation3], 1
    %12 = vsyncpa %s11, 0
    %13 = vsyncpa [#allocation6], 0
    %s14 = scalar_lea.sflag [#allocation6], 1
    %15 = vsyncpa %s14, 0
    %16 = vsyncpa [#allocation4], 0
    %s17 = scalar_lea.sflag [#allocation4], 1
    %18 = vsyncpa %s17, 0
    loop: start=0, step=1, limit=6
    $region2: #{tpu_custom_call.1} parent=1 // loop_pre_header
      _
    $region3: #{tpu_custom_call.1} parent=1 // loop_header
      %s20 = sphi 0, %s24
      %p21 = scmp.ge.s32.totalorder %s20, 6
      %s27 = sphi 0, %s39
      %s28 = sphi 0, %s35
      %s29 = sphi 0, %s27
      %s30 = sphi 0, %s28
      %s31 = sphi 0, %s29
      %s32 = sphi 0, %s30
      %s44 = sphi 0, %s46
      %s47 = sphi 0, %s44
      %s48 = sphi 0, %s47
      %s64 = sphi 0, %s48
      %s80 = sphi 0, %s82
      %s83 = sphi 0, %s80
      %s84 = sphi 0, %s83
      %s100 = sphi 0, %s84
      %s104 = sphi 0, %s104
      %s106 = sphi 0, %s104
      %s107 = sphi 0, %s106
      %s121 = sphi 0, %s107
      %s125 = sphi 0, %s125
      %s127 = sphi 0, %s125
      %s128 = sphi 0, %s127
      %s142 = sphi 0, %s128
      %s146 = sphi 0, %s146
      %s148 = sphi 0, %s146
      %s149 = sphi 0, %s148
      %s163 = sphi 0, %s149
      %s171 = sphi 0, %s173
      %s174 = sphi 0, %s171
      %s175 = sphi 0, %s174
      %s191 = sphi 0, %s175
    $region4: #{tpu_custom_call.1} parent=1 // loop_header_branch
      %23 = sbr.rel (%p21) target = $region8
    $region5: #{tpu_custom_call.1} parent=1 // loop_body
      %s25 = ssub.s32 %s20, 1
      %s26 = ssub.s32 %s20, 2
      %s33 = sadd.s32 1, %s28
      %p34 = scmp.ge.s32.totalorder %s33, 2
      %s35 = scalar_select %p34, 0, %s33
      %s36 = sadd.s32 1, %s27
      %s37 = scalar_select %p34, %s36, %s27
      %p38 = scmp.ge.s32.totalorder %s37, 2
      %s39 = scalar_select %p38, 0, %s37
      %s40 = ssub.s32 %s27, %s39
      %s41 = ssub.s32 %s28, %s35
      %s42 = sor.u32 %s40, %s41
      %p43 = scmp.eq.s32.totalorder %s42, 0
      %s45 = sadd.s32 %s44, 1
      %s46 = scalar_select %p43, %s44, %s45
      %p49 = pneg %p43
      %p50 = scmp.eq.s32.totalorder %s20, 3
      %p51 = por %p49, %p50
      %p52 = scmp.ne.s32.totalorder %s44, %s47
      %p53 = scmp.eq.s32.totalorder %s20, 0
      %p54 = por %p52, %p53
      %p55 = scmp.ne.s32.totalorder %s44, %s47
      %p56 = scmp.eq.s32.totalorder %s25, 3
      %p57 = por %p55, %p56
      %p58 = scmp.ne.s32.totalorder %s47, %s48
      %p59 = scmp.eq.s32.totalorder %s25, 0
      %p60 = por %p58, %p59
      %p61 = scmp.ne.s32.totalorder %s47, %s48
      %p62 = scmp.eq.s32.totalorder %s26, 3
      %p63 = por %p61, %p62
      %p65 = scmp.ne.s32.totalorder %s48, %s64
      %p66 = scmp.eq.s32.totalorder %s26, 0
      %p67 = por %p65, %p66
      %s68 = sadd.s32 %s28, 1
      %s69 = smul.u32 %s68, 8
      %p70 = scmp.lt.s32.totalorder %s69, 16
      %s71 = scalar_select %p70, %s69, 16
      %s72 = sadd.s32 %s35, 1
      %s73 = smul.u32 %s72, 8
      %p74 = scmp.lt.s32.totalorder %s73, 16
      %s75 = scalar_select %p74, %s73, 16
      %s76 = ssub.s32 %s27, %s39
      %s77 = ssub.s32 %s71, %s75
      %s78 = sor.u32 %s76, %s77
      %p79 = scmp.eq.s32.totalorder %s78, 0
      %s81 = sadd.s32 %s80, 1
      %s82 = scalar_select %p79, %s80, %s81
      %p85 = pneg %p79
      %p86 = scmp.eq.s32.totalorder %s20, 3
      %p87 = por %p85, %p86
      %p88 = scmp.ne.s32.totalorder %s80, %s83
      %p89 = scmp.eq.s32.totalorder %s20, 0
      %p90 = por %p88, %p89
      %p91 = scmp.ne.s32.totalorder %s80, %s83
      %p92 = scmp.eq.s32.totalorder %s25, 3
      %p93 = por %p91, %p92
      %p94 = scmp.ne.s32.totalorder %s83, %s84
      %p95 = scmp.eq.s32.totalorder %s25, 0
      %p96 = por %p94, %p95
      %p97 = scmp.ne.s32.totalorder %s83, %s84
      %p98 = scmp.eq.s32.totalorder %s26, 3
      %p99 = por %p97, %p98
      %p101 = scmp.ne.s32.totalorder %s84, %s100
      %p102 = scmp.eq.s32.totalorder %s26, 0
      %p103 = por %p101, %p102
      %s105 = sadd.s32 %s104, 1
      %p108 = scmp.eq.s32.totalorder %s20, 3
      %p109 = scmp.ne.s32.totalorder %s104, %s106
      %p110 = scmp.eq.s32.totalorder %s20, 0
      %p111 = por %p109, %p110
      %p112 = scmp.ne.s32.totalorder %s104, %s106
      %p113 = scmp.eq.s32.totalorder %s25, 3
      %p114 = por %p112, %p113
      %p115 = scmp.ne.s32.totalorder %s106, %s107
      %p116 = scmp.eq.s32.totalorder %s25, 0
      %p117 = por %p115, %p116
      %p118 = scmp.ne.s32.totalorder %s106, %s107
      %p119 = scmp.eq.s32.totalorder %s26, 3
      %p120 = por %p118, %p119
      %p122 = scmp.ne.s32.totalorder %s107, %s121
      %p123 = scmp.eq.s32.totalorder %s26, 0
      %p124 = por %p122, %p123
      %s126 = sadd.s32 %s125, 1
      %p129 = scmp.eq.s32.totalorder %s20, 3
      %p130 = scmp.ne.s32.totalorder %s125, %s127
      %p131 = scmp.eq.s32.totalorder %s20, 0
      %p132 = por %p130, %p131
      %p133 = scmp.ne.s32.totalorder %s125, %s127
      %p134 = scmp.eq.s32.totalorder %s25, 3
      %p135 = por %p133, %p134
      %p136 = scmp.ne.s32.totalorder %s127, %s128
      %p137 = scmp.eq.s32.totalorder %s25, 0
      %p138 = por %p136, %p137
      %p139 = scmp.ne.s32.totalorder %s127, %s128
      %p140 = scmp.eq.s32.totalorder %s26, 3
      %p141 = por %p139, %p140
      %p143 = scmp.ne.s32.totalorder %s128, %s142
      %p144 = scmp.eq.s32.totalorder %s26, 0
      %p145 = por %p143, %p144
      %s147 = sadd.s32 %s146, 1
      %p150 = scmp.eq.s32.totalorder %s20, 3
      %p151 = scmp.ne.s32.totalorder %s146, %s148
      %p152 = scmp.eq.s32.totalorder %s20, 0
      %p153 = por %p151, %p152
      %p154 = scmp.ne.s32.totalorder %s146, %s148
      %p155 = scmp.eq.s32.totalorder %s25, 3
      %p156 = por %p154, %p155
      %p157 = scmp.ne.s32.totalorder %s148, %s149
      %p158 = scmp.eq.s32.totalorder %s25, 0
      %p159 = por %p157, %p158
      %p160 = scmp.ne.s32.totalorder %s148, %s149
      %p161 = scmp.eq.s32.totalorder %s26, 3
      %p162 = por %p160, %p161
      %p164 = scmp.ne.s32.totalorder %s149, %s163
      %p165 = scmp.eq.s32.totalorder %s26, 0
      %p166 = por %p164, %p165
      %s167 = ssub.s32 %s27, %s39
      %s168 = ssub.s32 %s28, %s35
      %s169 = sor.u32 %s167, %s168
      %p170 = scmp.eq.s32.totalorder %s169, 0
      %s172 = sadd.s32 %s171, 1
      %s173 = scalar_select %p170, %s171, %s172
      %p176 = pneg %p170
      %p177 = scmp.eq.s32.totalorder %s20, 3
      %p178 = por %p176, %p177
      %p179 = scmp.ne.s32.totalorder %s171, %s174
      %p180 = scmp.eq.s32.totalorder %s20, 0
      %p181 = por %p179, %p180
      %p182 = scmp.ne.s32.totalorder %s171, %s174
      %p183 = scmp.eq.s32.totalorder %s25, 3
      %p184 = por %p182, %p183
      %p185 = scmp.ne.s32.totalorder %s174, %s175
      %p186 = scmp.eq.s32.totalorder %s25, 0
      %p187 = por %p185, %p186
      %p188 = scmp.ne.s32.totalorder %s174, %s175
      %p189 = scmp.eq.s32.totalorder %s26, 3
      %p190 = por %p188, %p189
      %p192 = scmp.ne.s32.totalorder %s175, %s191
      %p193 = scmp.eq.s32.totalorder %s26, 0
      %p194 = por %p192, %p193
      %p195 = scmp.le.s32.totalorder 1, %s20
      %p196 = scmp.lt.s32.totalorder %s20, 5
      %p197 = pnand %p195, %p196
      %p198 = pneg %p197
      // Predicated region
      $region9: #{tpu_custom_call.1} parent=5 // pred_check
        _
      $region10: #{tpu_custom_call.1} parent=5 // pred_check_branch
        %200 = sbr.rel (%p197) target = $region12
      $region11: #{tpu_custom_call.1} parent=5 // pred_region
        %s201 = ssub.s32 %s20, 1
        // Predicated region
        $region13: #{tpu_custom_call.1} parent=11 // pred_check
          %p202 = pneg %p117
        $region14: #{tpu_custom_call.1} parent=11 // pred_check_branch
          %204 = sbr.rel (%p202) target = $region16
        $region15: #{tpu_custom_call.1} parent=11 // pred_region
          %s206 = ssub.s32 128, 128
          %207 = vsyncadd [#allocation6], %s206
          %s209 = sshll.u32 [#allocation7], 4
          %s210 = int_to_ptr.vmem [resolvable:$true] %s209
          %212 = dma.hbm_to_vmem [thread:$0]  %s2, 128, %s210, [#allocation6]
        $region16: #{tpu_custom_call.1} parent=11 // pred_fallthru
          _
        // Predicated region
        $region17: #{tpu_custom_call.1} parent=11 // pred_check
          %p213 = pneg %p138
        $region18: #{tpu_custom_call.1} parent=11 // pred_check_branch
          %215 = sbr.rel (%p213) target = $region20
        $region19: #{tpu_custom_call.1} parent=11 // pred_region
          _
        $region20: #{tpu_custom_call.1} parent=11 // pred_fallthru
          _
        // Predicated region
        $region21: #{tpu_custom_call.1} parent=11 // pred_check
          %p216 = pneg %p159
        $region22: #{tpu_custom_call.1} parent=11 // pred_check_branch
          %218 = sbr.rel (%p216) target = $region24
        $region23: #{tpu_custom_call.1} parent=11 // pred_region
          _
        $region24: #{tpu_custom_call.1} parent=11 // pred_fallthru
          _
      $region12: #{tpu_custom_call.1} parent=5 // pred_fallthru
        _
      %p219 = scmp.lt.s32.totalorder %s20, 4
      // Predicated region
      $region25: #{tpu_custom_call.1} parent=5 // pred_check
        %p220 = pneg %p219
      $region26: #{tpu_custom_call.1} parent=5 // pred_check_branch
        %222 = sbr.rel (%p220) target = $region28
      $region27: #{tpu_custom_call.1} parent=5 // pred_region
        // Predicated region
        $region29: #{tpu_custom_call.1} parent=27 // pred_check
          %p223 = pneg %p54
        $region30: #{tpu_custom_call.1} parent=27 // pred_check_branch
          %225 = sbr.rel (%p223) target = $region32
        $region31: #{tpu_custom_call.1} parent=27 // pred_region
          %s226 = sand.u32 %s44, 1
          %s227 = scalar_lea.sflag [#allocation3], %s226
          %s228 = sand.u32 %s44, 1
          %s229 = smul.addr %s228, 64
          %s230 = scalar_lea.vmem [#allocation2], %s229
          %s231 = smul.u32 8, %s28
          %s232 = ssub.s32 17, %s231
          %p233 = scmp.lt.s32.totalorder %s232, 8
          %s234 = scalar_select %p233, %s232, 8
          %s235 = smul.u32 128, %s234
          %s237 = ssub.s32 1024, %s235
          %238 = vsyncadd %s227, %s237
          %p239 = scmp.ne.s32.totalorder 0, %s235
          %s240 = smul.addr %s27, 17
          %s241 = sadd.s32 %s231, %s240
          %s242 = smul.addr %s241, 128
          %s243 = scalar_lea.hbm %s0, %s242
          %s244 = smul.u32 8, %s234
          %s245 = sshll.u32 %s230, 4
          %s246 = int_to_ptr.vmem [resolvable:$true] %s245
          %s247 = sshll.u32 %s244, 4
          %251 = dma.hbm_to_vmem [thread:$0]  (%p239), %s243, %s247, %s246, %s227, 128, 128, 8
        $region32: #{tpu_custom_call.1} parent=27 // pred_fallthru
          _
        // Predicated region
        $region33: #{tpu_custom_call.1} parent=27 // pred_check
          %p252 = pneg %p90
        $region34: #{tpu_custom_call.1} parent=27 // pred_check_branch
          %254 = sbr.rel (%p252) target = $region36
        $region35: #{tpu_custom_call.1} parent=27 // pred_region
          %s255 = sand.u32 %s20, 1
          %s256 = scalar_lea.sflag [#allocation6], %s255
          %s257 = sand.u32 %s80, 1
          %s258 = smul.addr %s257, 8
          %s259 = scalar_lea.vmem [#allocation5], %s258
          %s260 = sadd.s32 %s28, 1
          %s261 = smul.u32 %s260, 8
          %p262 = scmp.lt.s32.totalorder %s261, 16
          %s263 = scalar_select %p262, %s261, 16
          %s265 = ssub.s32 128, 128
          %266 = vsyncadd %s256, %s265
          %s267 = smul.addr %s27, 17
          %s268 = sadd.s32 %s263, %s267
          %s269 = smul.addr %s268, 128
          %s270 = scalar_lea.hbm %s1, %s269
          %s272 = sshll.u32 %s259, 4
          %s273 = int_to_ptr.vmem [resolvable:$true] %s272
          %275 = dma.hbm_to_vmem [thread:$0]  %s270, 128, %s273, %s256
        $region36: #{tpu_custom_call.1} parent=27 // pred_fallthru
          _
      $region28: #{tpu_custom_call.1} parent=5 // pred_fallthru
        _
      %p276 = scmp.le.s32.totalorder 1, %s20
      %p277 = scmp.lt.s32.totalorder %s20, 5
      %p278 = pnand %p276, %p277
      %p279 = pneg %p278
      // Predicated region
      $region37: #{tpu_custom_call.1} parent=5 // pred_check
        _
      $region38: #{tpu_custom_call.1} parent=5 // pred_check_branch
        %281 = sbr.rel (%p278) target = $region40
      $region39: #{tpu_custom_call.1} parent=5 // pred_region
        %s282 = ssub.s32 %s20, 1
        %s283 = sand.u32 %s47, 1
        %s284 = scalar_lea.sflag [#allocation3], %s283
        %s285 = sand.u32 %s47, 1
        %s286 = smul.addr %s285, 64
        %s287 = scalar_lea.vmem [#allocation2], %s286
        // Predicated region
        $region41: #{tpu_custom_call.1} parent=39 // pred_check
          %p288 = pneg %p60
        $region42: #{tpu_custom_call.1} parent=39 // pred_check_branch
          %290 = sbr.rel (%p288) target = $region44
        $region43: #{tpu_custom_call.1} parent=39 // pred_region
          %291 = dma.done %s284, 1024
        $region44: #{tpu_custom_call.1} parent=39 // pred_fallthru
          _
        %s292 = sand.u32 %s25, 1
        %s293 = scalar_lea.sflag [#allocation6], %s292
        %s294 = sand.u32 %s83, 1
        %s295 = smul.addr %s294, 8
        %s296 = scalar_lea.vmem [#allocation5], %s295
        // Predicated region
        $region45: #{tpu_custom_call.1} parent=39 // pred_check
          %p297 = pneg %p96
        $region46: #{tpu_custom_call.1} parent=39 // pred_check_branch
          %299 = sbr.rel (%p297) target = $region48
        $region47: #{tpu_custom_call.1} parent=39 // pred_region
          %300 = dma.done %s293, 128
        $region48: #{tpu_custom_call.1} parent=39 // pred_fallthru
          _
        // Predicated region
        $region49: #{tpu_custom_call.1} parent=39 // pred_check
          %p301 = pneg %p117
        $region50: #{tpu_custom_call.1} parent=39 // pred_check_branch
          %303 = sbr.rel (%p301) target = $region52
        $region51: #{tpu_custom_call.1} parent=39 // pred_region
          %304 = dma.done [#allocation6], 128
        $region52: #{tpu_custom_call.1} parent=39 // pred_fallthru
          _
        %s305 = sand.u32 %s47, 1
        %s306 = scalar_lea.sflag [#allocation3], %s305
        %s307 = sand.u32 %s47, 1
        %s308 = smul.addr %s307, 64
        %s309 = scalar_lea.vmem [#allocation2], %s308
        %p310 = pneg %p60
        %p311 = pneg %p57
        %s312 = sand.u32 %s25, 1
        %s313 = scalar_lea.sflag [#allocation6], %s312
        %s314 = sand.u32 %s83, 1
        %s315 = smul.addr %s314, 8
        %s316 = scalar_lea.vmem [#allocation5], %s315
        %p317 = pneg %p96
        %p318 = pneg %p93
        %p319 = pneg %p117
        %p320 = pneg %p114
        %p321 = pneg %p138
        %p322 = pneg %p135
        %p323 = pneg %p159
        %p324 = pneg %p156
        %p325 = pneg %p187
        %p326 = pneg %p184
        %s327 = sand.u32 %s174, 1
        %s328 = scalar_lea.sflag [#allocation4], %s327
        %s329 = sand.u32 %s174, 1
        %s330 = smul.addr %s329, 8
        %s331 = scalar_lea.vmem [#allocation8], %s330
        %s332 = smul.u32 8, %s30
        %s333 = ssub.s32 17, %s332
        %p334 = scmp.lt.s32.totalorder %s333, 8
        %s335 = scalar_select %p334, %s333, 8
        %s336 = smul.u32 128, %s335
        %s337 = sadd.s32 %s30, 1
        %s338 = smul.u32 %s337, 8
        %p339 = scmp.lt.s32.totalorder %s338, 16
        %s340 = scalar_select %p339, %s338, 16
        %v341 = vld [vmem:[%s287] sm:$0xff]
        %v342 = vld [vmem:[%s287 + $0x8] sm:$0xff]
        %v343 = vld [vmem:[%s287 + $0x10] sm:$0xff]
        %v344 = vld [vmem:[%s287 + $0x18] sm:$0xff]
        %v345 = vld [vmem:[%s287 + $0x20] sm:$0xff]
        %v346 = vld [vmem:[%s287 + $0x28] sm:$0xff]
        %v347 = vld [vmem:[%s287 + $0x30] sm:$0xff]
        %v348 = vld [vmem:[%s287 + $0x38] sm:$0xff]
        %v349 = vld [vmem:[#allocation7] sm:$0xff]
        %v350 = vld [vmem:[%s296] sm:$0xff]
        %v351 = vlaneseq
        %v352 = vshrl.u32 %v351, 7
        %s353 = sadd.s32 %s30, 1
        %s354 = smul.u32 %s353, 64
        %v355 = vstv %s354
        %v356 = vadd.s32 %v355, %v352
        %vm357 = vcmp.lt.s32.totalorder %v356, 136
        %v358 = vsel %vm357, 1, 0
        %vm359 = vcmp.eq.s32.totalorder %v358, 1
        %v360 = vsel %vm359, %v350, 0.0
        %v361 = vld [vmem:[%s3] sm:$0xff]
        %vm362 = vcmask 64512
        %v364 = vsel %vm362, %v361, 0
        %366 = vmatprep.subr.mxu0 0.0
        %367 = vmatpush1.msra.mxu0 %v360
        %368 = vmatprep.subr.mxu0 0.0
        %369 = vmatpush1.msra.mxu0 0.0
        %370 = vmatprep.subr.mxu0 0.0
        %371 = vmatpush1.msra.mxu0 0.0
        %372 = vmatprep.subr.mxu0 0.0
        %373 = vmatpush1.msra.mxu0 0.0
        %374 = vmatprep.subr.mxu0 0.0
        %375 = vmatpush1.msra.mxu0 0.0
        %376 = vmatprep.subr.mxu0 0.0
        %377 = vmatpush1.msra.mxu0 0.0
        %378 = vmatprep.subr.mxu0 0.0
        %379 = vmatpush1.msra.mxu0 0.0
        %380 = vmatprep.subr.mxu0 0.0
        %381 = vmatpush1.msra.mxu0 0.0
        %382 = vmatprep.subr.mxu0 0.0
        %383 = vmatpush1.msra.mxu0 0.0
        %384 = vmatprep.subr.mxu0 0.0
        %385 = vmatpush1.msra.mxu0 0.0
        %386 = vmatprep.subr.mxu0 0.0
        %387 = vmatpush1.msra.mxu0 0.0
        %388 = vmatprep.subr.mxu0 0.0
        %389 = vmatpush1.msra.mxu0 0.0
        %390 = vmatprep.subr.mxu0 0.0
        %391 = vmatpush1.msra.mxu0 0.0
        %392 = vmatprep.subr.mxu0 0.0
        %393 = vmatpush1.msra.mxu0 0.0
        %394 = vmatprep.subr.mxu0 0.0
        %395 = vmatpush1.msra.mxu0 0.0
        %396 = vmatprep.subr.mxu0 0.0
        %397 = vmatpush1.msra.mxu0 0.0
        %398 = vmatprep.subr.mxu0 0.0
        %399 = vmatpush1.msra.mxu0 0.0
        %400 = vmatprep.subr.mxu0 0.0
        %401 = vmatpush1.msra.mxu0 0.0
        %402 = vmatprep.subr.mxu0 0.0
        %403 = vmatpush1.msra.mxu0 0.0
        %404 = vmatprep.subr.mxu0 0.0
        %405 = vmatpush1.msra.mxu0 0.0
        %406 = vmatprep.subr.mxu0 0.0
        %407 = vmatpush1.msra.mxu0 0.0
        %408 = vmatprep.subr.mxu0 0.0
        %409 = vmatpush1.msra.mxu0 0.0
        %410 = vmatprep.subr.mxu0 0.0
        %411 = vmatpush1.msra.mxu0 0.0
        %412 = vmatprep.subr.mxu0 0.0
        %413 = vmatpush1.msra.mxu0 0.0
        %414 = vmatprep.subr.mxu0 0.0
        %415 = vmatpush1.msra.mxu0 0.0
        %416 = vmatprep.subr.mxu0 0.0
        %417 = vmatpush1.msra.mxu0 0.0
        %418 = vmatprep.subr.mxu0 0.0
        %419 = vmatpush1.msra.mxu0 0.0
        %420 = vmatprep.subr.mxu0 0.0
        %421 = vmatpush1.msra.mxu0 0.0
        %422 = vmatprep.subr.mxu0 0.0
        %423 = vmatpush1.msra.mxu0 0.0
        %424 = vmatprep.subr.mxu0 0.0
        %425 = vmatpush1.msra.mxu0 0.0
        %426 = vmatprep.subr.mxu0 0.0
        %427 = vmatpush1.msra.mxu0 0.0
        %428 = vmatprep.subr.mxu0 0.0
        %429 = vmatpush1.msra.mxu0 0.0
        %430 = vmatprep.mubr.f32.mxu0 0.0
        %431 = vmatmul.mubr.f32.gmra.mrb[0].mxu0 %v364
        %v432 = vpop.f32.mrb[0].mxu0
        %v433 = vadd.f32 0.0, %v432
        %v434 = vpop.f32.mrb[0].mxu0
        %435 = vdwg.mxu0
        %vm436 = vcmask 523264
        %v438 = vsel %vm436, %v349, 0
        %440 = vmatprep.subr.mxu0 0.0
        %441 = vmatpush1.msra.mxu0 %v341
        %442 = vmatprep.subr.mxu0 0.0
        %443 = vmatpush1.msra.mxu0 %v342
        %444 = vmatprep.subr.mxu0 0.0
        %445 = vmatpush1.msra.mxu0 %v343
        %446 = vmatprep.subr.mxu0 0.0
        %447 = vmatpush1.msra.mxu0 %v344
        %448 = vmatprep.subr.mxu0 0.0
        %449 = vmatpush1.msra.mxu0 %v345
        %450 = vmatprep.subr.mxu0 0.0
        %451 = vmatpush1.msra.mxu0 %v346
        %452 = vmatprep.subr.mxu0 0.0
        %453 = vmatpush1.msra.mxu0 %v347
        %454 = vmatprep.subr.mxu0 0.0
        %455 = vmatpush1.msra.mxu0 %v348
        %456 = vmatprep.subr.mxu0 0.0
        %457 = vmatpush1.msra.mxu0 0.0
        %458 = vmatprep.subr.mxu0 0.0
        %459 = vmatpush1.msra.mxu0 0.0
        %460 = vmatprep.subr.mxu0 0.0
        %461 = vmatpush1.msra.mxu0 0.0
        %462 = vmatprep.subr.mxu0 0.0
        %463 = vmatpush1.msra.mxu0 0.0
        %464 = vmatprep.subr.mxu0 0.0
        %465 = vmatpush1.msra.mxu0 0.0
        %466 = vmatprep.subr.mxu0 0.0
        %467 = vmatpush1.msra.mxu0 0.0
        %468 = vmatprep.subr.mxu0 0.0
        %469 = vmatpush1.msra.mxu0 0.0
        %470 = vmatprep.subr.mxu0 0.0
        %471 = vmatpush1.msra.mxu0 0.0
        %472 = vmatprep.subr.mxu0 0.0
        %473 = vmatpush1.msra.mxu0 0.0
        %474 = vmatprep.subr.mxu0 0.0
        %475 = vmatpush1.msra.mxu0 0.0
        %476 = vmatprep.subr.mxu0 0.0
        %477 = vmatpush1.msra.mxu0 0.0
        %478 = vmatprep.subr.mxu0 0.0
        %479 = vmatpush1.msra.mxu0 0.0
        %480 = vmatprep.subr.mxu0 0.0
        %481 = vmatpush1.msra.mxu0 0.0
        %482 = vmatprep.subr.mxu0 0.0
        %483 = vmatpush1.msra.mxu0 0.0
        %484 = vmatprep.subr.mxu0 0.0
        %485 = vmatpush1.msra.mxu0 0.0
        %486 = vmatprep.subr.mxu0 0.0
        %487 = vmatpush1.msra.mxu0 0.0
        %488 = vmatprep.subr.mxu0 0.0
        %489 = vmatpush1.msra.mxu0 0.0
        %490 = vmatprep.subr.mxu0 0.0
        %491 = vmatpush1.msra.mxu0 0.0
        %492 = vmatprep.subr.mxu0 0.0
        %493 = vmatpush1.msra.mxu0 0.0
        %494 = vmatprep.subr.mxu0 0.0
        %495 = vmatpush1.msra.mxu0 0.0
        %496 = vmatprep.subr.mxu0 0.0
        %497 = vmatpush1.msra.mxu0 0.0
        %498 = vmatprep.subr.mxu0 0.0
        %499 = vmatpush1.msra.mxu0 0.0
        %500 = vmatprep.subr.mxu0 0.0
        %501 = vmatpush1.msra.mxu0 0.0
        %502 = vmatprep.subr.mxu0 0.0
        %503 = vmatpush1.msra.mxu0 0.0
        %504 = vmatprep.mubr.f32.mxu0 0.0
        %505 = vmatmul.mubr.f32.gmra.mrb[0].mxu0 %v438
        %v506 = vpop.f32.mrb[0].mxu0
        %v507 = vadd.f32 %v433, %v506
        %v508 = vpop.f32.mrb[0].mxu0
        %509 = vdwg.mxu0
        %v510 = vld [vmem:[%s4] sm:$0x1]
        %v512 = vlaneseq
        %v513 = vshrl.u32 %v512, 7
        %v514 = vsub.s32 0, %v513
        %v515 = vrot.slane %v510, %v514
        %v517 = vadd.f32 %v507, %v515
        %518 = vst [vmem:[%s331] sm:$0xff] %v517
        %s519 = sand.u32 %s174, 1
        %s520 = scalar_lea.sflag [#allocation4], %s519
        %s521 = sand.u32 %s174, 1
        %s522 = smul.addr %s521, 8
        %s523 = scalar_lea.vmem [#allocation8], %s522
        // Predicated region
        $region53: #{tpu_custom_call.1} parent=39 // pred_check
          %p524 = pneg %p184
        $region54: #{tpu_custom_call.1} parent=39 // pred_check_branch
          %526 = sbr.rel (%p524) target = $region56
        $region55: #{tpu_custom_call.1} parent=39 // pred_region
          %s528 = ssub.s32 128, 128
          %529 = vsyncadd %s520, %s528
          %s530 = smul.addr %s29, 2
          %s531 = sadd.s32 %s30, %s530
          %s532 = smul.addr %s531, 128
          %s533 = scalar_lea.hbm %s5, %s532
          %s535 = sshll.u32 %s523, 4
          %s536 = int_to_ptr.vmem [resolvable:$true] %s535
          %538 = dma.vmem_to_hbm [thread:$0]  %s536, 128, %s533, %s520
        $region56: #{tpu_custom_call.1} parent=39 // pred_fallthru
          _
      $region40: #{tpu_custom_call.1} parent=5 // pred_fallthru
        _
      %p539 = scmp.le.s32.totalorder 2, %s20
      // Predicated region
      $region57: #{tpu_custom_call.1} parent=5 // pred_check
        %p540 = pneg %p539
      $region58: #{tpu_custom_call.1} parent=5 // pred_check_branch
        %542 = sbr.rel (%p540) target = $region60
      $region59: #{tpu_custom_call.1} parent=5 // pred_region
        %s543 = ssub.s32 %s20, 2
        // Predicated region
        $region61: #{tpu_custom_call.1} parent=59 // pred_check
          %p544 = pneg %p190
        $region62: #{tpu_custom_call.1} parent=59 // pred_check_branch
          %546 = sbr.rel (%p544) target = $region64
        $region63: #{tpu_custom_call.1} parent=59 // pred_region
          %s547 = sand.u32 %s175, 1
          %s548 = scalar_lea.sflag [#allocation4], %s547
          %s549 = sand.u32 %s175, 1
          %s550 = smul.addr %s549, 8
          %s551 = scalar_lea.vmem [#allocation8], %s550
          %552 = dma.done %s548, 128
        $region64: #{tpu_custom_call.1} parent=59 // pred_fallthru
          _
      $region60: #{tpu_custom_call.1} parent=5 // pred_fallthru
        _
    $region6: #{tpu_custom_call.1} parent=1 // loop_footer
      %s24 = sadd.s32 1, %s20
    $region7: #{tpu_custom_call.1} parent=1 // loop_footer_branch
      %19 = sbr.rel target = $region3
    $region8: #{tpu_custom_call.1} parent=1 // loop_exit
      _
    %553 = vsyncpa [#allocation3], 1
    %s554 = scalar_lea.sflag [#allocation3], 1
    %555 = vsyncpa %s554, 1
    %556 = vsyncpa [#allocation6], 1
    %s557 = scalar_lea.sflag [#allocation6], 1
    %558 = vsyncpa %s557, 1
    %559 = vsyncpa [#allocation4], 1
    %s560 = scalar_lea.sflag [#allocation4], 1
    %561 = vsyncpa %s560, 1

</llo_original>
